<compile_context>
chip_gen: v5e
topology: v5e:2x2
jax: 0.10.0
libtpu: 0.0.40
codegen_flags: <defaults>
</compile_context>

<pallas_src>
import jax
import jax.numpy as jnp
import numpy as np
from jax.experimental import pallas as pl
from jax.experimental.pallas import tpu as pltpu

IN_DIM = 28 * 28                     # 784
H1, H2, OUT = 120, 84, 10            # logical (PyTorch) sizes
H1_P, H2_P, OUT_P = 128, 128, 128    # lane-padded sizes used by the kernel


def mlp_kernel(x_ref, w1_ref, b1_ref, w2_ref, b2_ref, w3_ref, b3_ref, o_ref):
    # x arrives as f32 straight from HBM (no wrapper-side cast pass); cast to
    # the weight dtype (bf16) on the VPU right before feeding the MXU.
    x = x_ref[...].astype(w1_ref.dtype)
    # fc1 + ReLU  (bf16 MXU inputs, f32 accumulate + f32 epilogue)
    h1 = jnp.dot(x, w1_ref[...], preferred_element_type=jnp.float32)
    h1 = jnp.maximum(h1 + b1_ref[...], 0.0)
    # fc2 + ReLU
    h2 = jnp.dot(h1.astype(w2_ref.dtype), w2_ref[...],
                 preferred_element_type=jnp.float32)
    h2 = jnp.maximum(h2 + b2_ref[...], 0.0)
    # fc3 (no activation); store in the (possibly bf16) output dtype.
    h3 = jnp.dot(h2.astype(w3_ref.dtype), w3_ref[...],
                 preferred_element_type=jnp.float32)
    o_ref[...] = (h3 + b3_ref[...]).astype(o_ref.dtype)


def _round_up(n, m):
    return ((n + m - 1) // m) * m


def _pad_to(a, shape):
    return jnp.pad(a, [(0, s - d) for d, s in zip(a.shape, shape)])


def pad_params(params):
    """Zero-pad weights/biases to 128-lane-aligned shapes (done once, outside kernel)."""
    w1, b1, w2, b2, w3, b3 = params
    return (
        _pad_to(w1, (IN_DIM, H1_P)), _pad_to(b1, (1, H1_P)),
        _pad_to(w2, (H1_P, H2_P)),   _pad_to(b2, (1, H2_P)),
        _pad_to(w3, (H2_P, OUT_P)),  _pad_to(b3, (1, OUT_P)),
    )


def net_forward(x_nchw, padded_params, *, tile_b=1024, use_bf16=True):
    """x_nchw: (B, 1, 28, 28) float32. Returns (B, 10) float32 logits."""
    w1, b1, w2, b2, w3, b3 = padded_params
    B = x_nchw.shape[0]
    x = x_nchw.reshape(B, IN_DIM)    # == x.view(x.size()[0], -1); stays f32

    # Batch tile: multiple of 16 (bf16 output sublane tile), capped at
    # ceil(B/2) so the grid has >=2 steps when possible (v7x megacore), and at
    # tile_b (default 1024 keeps f32 double-buffered x tiles inside v5e's
    # 16 MiB default scoped VMEM).
    half = -(-B // 2)
    tb = min(tile_b, _round_up(half, 16))
    tb = _round_up(max(tb, 16), 16)
    grid = (pl.cdiv(B, tb),)         # partial last tile handled by Pallas

    cdt = jnp.bfloat16 if use_bf16 else jnp.float32
    w1c, w2c, w3c = (w.astype(cdt) for w in (w1, w2, w3))
    b1f, b2f, b3f = (b.astype(jnp.float32) for b in (b1, b2, b3))
    out_dtype = jnp.bfloat16 if use_bf16 else jnp.float32

    flops = 2 * B * (IN_DIM * H1_P + H1_P * H2_P + H2_P * OUT_P)
    bytes_accessed = (
        B * IN_DIM * x.dtype.itemsize                        # f32 x stream
        + sum(int(a.size) * a.dtype.itemsize
              for a in (w1c, b1f, w2c, b2f, w3c, b3f))       # resident params
        + B * OUT_P * jnp.dtype(out_dtype).itemsize)         # bf16 writeback

    out = pl.pallas_call(
        mlp_kernel,
        out_shape=jax.ShapeDtypeStruct((B, OUT_P), out_dtype),
        grid=grid,
        in_specs=[
            # x: streamed per batch tile (pipelined HBM->VMEM DMA), f32.
            pl.BlockSpec((tb, IN_DIM), lambda i: (i, 0)),
            # weights / biases: constant index_map -> fetched once, stay resident.
            pl.BlockSpec((IN_DIM, H1_P), lambda i: (0, 0)),
            pl.BlockSpec((1, H1_P),      lambda i: (0, 0)),
            pl.BlockSpec((H1_P, H2_P),   lambda i: (0, 0)),
            pl.BlockSpec((1, H2_P),      lambda i: (0, 0)),
            pl.BlockSpec((H2_P, OUT_P),  lambda i: (0, 0)),
            pl.BlockSpec((1, OUT_P),     lambda i: (0, 0)),
        ],
        out_specs=pl.BlockSpec((tb, OUT_P), lambda i: (i, 0)),
        compiler_params=pltpu.CompilerParams(
            dimension_semantics=("parallel",)),
        cost_estimate=pl.CostEstimate(
            flops=flops, transcendentals=0, bytes_accessed=bytes_accessed),
    )(x, w1c, b1f, w2c, b2f, w3c, b3f)

    # Slice off lane padding (logits live in the first 10 lanes); f32 for callers.
    return out[:, :OUT].astype(jnp.float32)


def init_params(key):
    """Deterministic init mimicking torch.nn.Linear default
    (U[-1/sqrt(fan_in), +1/sqrt(fan_in)]). Weights stored transposed vs PyTorch
    as (in_features, out_features) so the kernel computes x @ W + b."""
    dims = [(IN_DIM, H1), (H1, H2), (H2, OUT)]
    params = []
    for fan_in, fan_out in dims:
        kw, kb, key = jax.random.split(key, 3)
        bound = 1.0 / np.sqrt(fan_in)
        w = jax.random.uniform(kw, (fan_in, fan_out), jnp.float32, -bound, bound)
        b = jax.random.uniform(kb, (1, fan_out), jnp.float32, -bound, bound)
        params.extend([w, b])
    return tuple(params)


def reference_forward(x_nchw, params):
    w1, b1, w2, b2, w3, b3 = params
    x = x_nchw.reshape(x_nchw.shape[0], -1)
    h1 = jnp.maximum(x @ w1 + b1, 0.0)
    h2 = jnp.maximum(h1 @ w2 + b2, 0.0)
    return h2 @ w3 + b3


if __name__ == "__main__":
    key = jax.random.PRNGKey(0)
    kx1, kx2, kp = jax.random.split(key, 3)
    raw_params = init_params(kp)
    padded_params = pad_params(raw_params)

    # Test 1: tiny batch (single, partial tile).
    x_small = jax.random.normal(kx1, (2, 1, 28, 28), jnp.float32)
    out_small = jax.block_until_ready(net_forward(x_small, padded_params))
    ref_small = reference_forward(x_small, raw_params)
    # bf16 MXU inputs / bf16 writeback -> loosened tolerance vs f32 reference
    # (intentional; f32 accumulation keeps error ~1e-3 on these magnitudes).
    np.testing.assert_allclose(np.asarray(out_small), np.asarray(ref_small),
                               rtol=2e-2, atol=5e-2)
    assert out_small.shape == (2, 10)

    # Test 2: batch not a multiple of the tile -> multi-step grid with a
    # partial final tile (exercises the pipelined path, no wrapper-side pad).
    x_multi = jax.random.normal(kx2, (40, 1, 28, 28), jnp.float32)
    out_multi = jax.block_until_ready(
        net_forward(x_multi, padded_params, tile_b=16))
    ref_multi = reference_forward(x_multi, raw_params)
    np.testing.assert_allclose(np.asarray(out_multi), np.asarray(ref_multi),
                               rtol=2e-2, atol=5e-2)
    assert out_multi.shape == (40, 10)

    print("KERNEL_OK")
</pallas_src>

<mosaic_0001>
module attributes {stable_mosaic.version = 11 : i64} {
  func.func @mlp_kernel(%arg0: i32, %arg1: memref<16x784xf32, #tpu.memory_space<vmem>>, %arg2: memref<784x128xbf16, #tpu.memory_space<vmem>>, %arg3: memref<1x128xf32, #tpu.memory_space<vmem>>, %arg4: memref<128x128xbf16, #tpu.memory_space<vmem>>, %arg5: memref<1x128xf32, #tpu.memory_space<vmem>>, %arg6: memref<128x128xbf16, #tpu.memory_space<vmem>>, %arg7: memref<1x128xf32, #tpu.memory_space<vmem>>, %arg8: memref<16x128xbf16, #tpu.memory_space<vmem>>) attributes {dimension_semantics = [#tpu.dimension_semantics<parallel>], iteration_bounds = array<i64: 1>, scalar_prefetch = 0 : i64, scratch_operands = 0 : i64, tpu.core_type = #tpu.core_type<tc>, window_params = [{transform_indices = @transform_0, window_bounds = array<i64: 16, 784>}, {pipeline_mode = #tpu.pipeline_mode<synchronous>, transform_indices = @transform_1, window_bounds = array<i64: 784, 128>}, {pipeline_mode = #tpu.pipeline_mode<synchronous>, transform_indices = @transform_2, window_bounds = array<i64: 1, 128>}, {pipeline_mode = #tpu.pipeline_mode<synchronous>, transform_indices = @transform_3, window_bounds = array<i64: 128, 128>}, {pipeline_mode = #tpu.pipeline_mode<synchronous>, transform_indices = @transform_4, window_bounds = array<i64: 1, 128>}, {pipeline_mode = #tpu.pipeline_mode<synchronous>, transform_indices = @transform_5, window_bounds = array<i64: 128, 128>}, {pipeline_mode = #tpu.pipeline_mode<synchronous>, transform_indices = @transform_6, window_bounds = array<i64: 1, 128>}, {transform_indices = @transform_7, window_bounds = array<i64: 16, 128>}]} {
    %c0 = arith.constant 0 : index
    %c0_0 = arith.constant 0 : index
    %0 = vector.load %arg1[%c0, %c0_0] : memref<16x784xf32, #tpu.memory_space<vmem>>, vector<16x784xf32>
    %1 = arith.truncf %0 : vector<16x784xf32> to vector<16x784xbf16>
    %c0_1 = arith.constant 0 : index
    %c0_2 = arith.constant 0 : index
    %2 = vector.load %arg2[%c0_1, %c0_2] : memref<784x128xbf16, #tpu.memory_space<vmem>>, vector<784x128xbf16>
    %cst = arith.constant dense<0.000000e+00> : vector<16x128xf32>
    %3 = tpu.matmul %1, %2, %cst {dimension_numbers = #tpu.dot_dimension_numbers<[1], [0], [0], [1], [0, 0, 1, 1], [], []>} : vector<16x784xbf16>, vector<784x128xbf16>, vector<16x128xf32> -> vector<16x128xf32>
    %c0_3 = arith.constant 0 : index
    %c0_4 = arith.constant 0 : index
    %4 = vector.load %arg3[%c0_3, %c0_4] : memref<1x128xf32, #tpu.memory_space<vmem>>, vector<1x128xf32>
    %5 = vector.broadcast %4 : vector<1x128xf32> to vector<16x128xf32>
    %6 = arith.addf %3, %5 : vector<16x128xf32>
    %cst_5 = arith.constant 0.000000e+00 : f32
    %7 = vector.broadcast %cst_5 : f32 to vector<16x128xf32>
    %8 = arith.maximumf %6, %7 : vector<16x128xf32>
    %9 = arith.truncf %8 : vector<16x128xf32> to vector<16x128xbf16>
    %c0_6 = arith.constant 0 : index
    %c0_7 = arith.constant 0 : index
    %10 = vector.load %arg4[%c0_6, %c0_7] : memref<128x128xbf16, #tpu.memory_space<vmem>>, vector<128x128xbf16>
    %cst_8 = arith.constant dense<0.000000e+00> : vector<16x128xf32>
    %11 = tpu.matmul %9, %10, %cst_8 {dimension_numbers = #tpu.dot_dimension_numbers<[1], [0], [0], [1], [0, 0, 1, 1], [], []>} : vector<16x128xbf16>, vector<128x128xbf16>, vector<16x128xf32> -> vector<16x128xf32>
    %c0_9 = arith.constant 0 : index
    %c0_10 = arith.constant 0 : index
    %12 = vector.load %arg5[%c0_9, %c0_10] : memref<1x128xf32, #tpu.memory_space<vmem>>, vector<1x128xf32>
    %13 = vector.broadcast %12 : vector<1x128xf32> to vector<16x128xf32>
    %14 = arith.addf %11, %13 : vector<16x128xf32>
    %cst_11 = arith.constant 0.000000e+00 : f32
    %15 = vector.broadcast %cst_11 : f32 to vector<16x128xf32>
    %16 = arith.maximumf %14, %15 : vector<16x128xf32>
    %17 = arith.truncf %16 : vector<16x128xf32> to vector<16x128xbf16>
    %c0_12 = arith.constant 0 : index
    %c0_13 = arith.constant 0 : index
    %18 = vector.load %arg6[%c0_12, %c0_13] : memref<128x128xbf16, #tpu.memory_space<vmem>>, vector<128x128xbf16>
    %cst_14 = arith.constant dense<0.000000e+00> : vector<16x128xf32>
    %19 = tpu.matmul %17, %18, %cst_14 {dimension_numbers = #tpu.dot_dimension_numbers<[1], [0], [0], [1], [0, 0, 1, 1], [], []>} : vector<16x128xbf16>, vector<128x128xbf16>, vector<16x128xf32> -> vector<16x128xf32>
    %c0_15 = arith.constant 0 : index
    %c0_16 = arith.constant 0 : index
    %20 = vector.load %arg7[%c0_15, %c0_16] : memref<1x128xf32, #tpu.memory_space<vmem>>, vector<1x128xf32>
    %21 = vector.broadcast %20 : vector<1x128xf32> to vector<16x128xf32>
    %22 = arith.addf %19, %21 : vector<16x128xf32>
    %23 = arith.truncf %22 : vector<16x128xf32> to vector<16x128xbf16>
    %c0_17 = arith.constant 0 : index
    %c0_18 = arith.constant 0 : index
    %24 = vector.load %arg8[%c0_17, %c0_18] : memref<16x128xbf16, #tpu.memory_space<vmem>>, vector<16x128xbf16>
    tpu.vector_store %arg8[%c0_17, %c0_18], %23 {strides = array<i32>} : memref<16x128xbf16, #tpu.memory_space<vmem>>, vector<16x128xbf16>,
    return
  }
  func.func @transform_0(%arg0: i32) -> (i32, i32) {
    %c0_i32 = arith.constant 0 : i32
    %c0_i32_0 = arith.constant 0 : i32
    return %arg0, %c0_i32 : i32, i32
  }
  func.func @transform_1(%arg0: i32) -> (i32, i32) {
    %c0_i32 = arith.constant 0 : i32
    %c0_i32_0 = arith.constant 0 : i32
    %c0_i32_1 = arith.constant 0 : i32
    return %c0_i32, %c0_i32_0 : i32, i32
  }
  func.func @transform_2(%arg0: i32) -> (i32, i32) {
    %c0_i32 = arith.constant 0 : i32
    %c0_i32_0 = arith.constant 0 : i32
    %c0_i32_1 = arith.constant 0 : i32
    return %c0_i32, %c0_i32_0 : i32, i32
  }
  func.func @transform_3(%arg0: i32) -> (i32, i32) {
    %c0_i32 = arith.constant 0 : i32
    %c0_i32_0 = arith.constant 0 : i32
    %c0_i32_1 = arith.constant 0 : i32
    return %c0_i32, %c0_i32_0 : i32, i32
  }
  func.func @transform_4(%arg0: i32) -> (i32, i32) {
    %c0_i32 = arith.constant 0 : i32
    %c0_i32_0 = arith.constant 0 : i32
    %c0_i32_1 = arith.constant 0 : i32
    return %c0_i32, %c0_i32_0 : i32, i32
  }
  func.func @transform_5(%arg0: i32) -> (i32, i32) {
    %c0_i32 = arith.constant 0 : i32
    %c0_i32_0 = arith.constant 0 : i32
    %c0_i32_1 = arith.constant 0 : i32
    return %c0_i32, %c0_i32_0 : i32, i32
  }
  func.func @transform_6(%arg0: i32) -> (i32, i32) {
    %c0_i32 = arith.constant 0 : i32
    %c0_i32_0 = arith.constant 0 : i32
    %c0_i32_1 = arith.constant 0 : i32
    return %c0_i32, %c0_i32_0 : i32, i32
  }
  func.func @transform_7(%arg0: i32) -> (i32, i32) {
    %c0_i32 = arith.constant 0 : i32
    %c0_i32_0 = arith.constant 0 : i32
    return %arg0, %c0_i32 : i32, i32
  }
}

</mosaic_0001>

<llo_original>
// kernel: tpu_custom_call.1
$region0: #{tpu_custom_call.1}
  #allocation0 [shape = 'u32[]', space=smem, size = 0x4, offset = 0x4, fixed_abs, tag = 'smem constant byte address 0x4 - core index']
  #allocation1 [shape = 'u32[72,128]{1,0:T(1,128)}', space=vmem, size = 0x9000, scoped, tag = 'internal scratch']
  %s0 = inlined_call_operand.hbm [shape: f32[2,784], index: 0, kind: input, shape index: {}]
  %s1 = inlined_call_operand.hbm [shape: bf16[784,128], index: 1, kind: input, shape index: {}]
  %s2 = inlined_call_operand.vmem [shape: f32[1,128], index: 2, kind: input, shape index: {}]
  %s3 = inlined_call_operand.hbm [shape: bf16[128,128], index: 3, kind: input, shape index: {}]
  %s4 = inlined_call_operand.vmem [shape: f32[1,128], index: 4, kind: input, shape index: {}]
  %s5 = inlined_call_operand.hbm [shape: bf16[128,128], index: 5, kind: input, shape index: {}]
  %s6 = inlined_call_operand.vmem [shape: f32[1,128], index: 6, kind: input, shape index: {}]
  %s7 = inlined_call_operand.hbm [shape: bf16[2,128], index: 7, kind: output, shape index: {}]
  %s8 = sld [smem:[#allocation0]]
  $region54: #{tpu_custom_call.1} parent=0
    _
  %s10 = ssub.s32 1, %s8
  %s11 = scalar_select 0, %s10, %s8
  $region1: #{tpu_custom_call.1} parent=0
    #allocation2 [shape = 'u8[57344]{0}', space=vmem, size = 0xe000, scoped, tag = 'input window, operand 0, single buffered']
    #allocation3 [shape = 's32[1]{0}', space=sflag, size = 0x4, scoped, tag = 'scoped memory for tpu_custom_call.1']
    #allocation4 [shape = 's32[1]{0}', space=sflag, size = 0x4, scoped, tag = 'scoped memory for tpu_custom_call.1']
    #allocation5 [shape = 'u8[200704]{0}', space=vmem, size = 0x31000, scoped, tag = 'input window, operand 1, single buffered']
    #allocation6 [shape = 's32[1]{0}', space=sflag, size = 0x4, scoped, tag = 'scoped memory for tpu_custom_call.1']
    #allocation7 [shape = 'u8[32768]{0}', space=vmem, size = 0x8000, scoped, tag = 'input window, operand 3, single buffered']
    #allocation8 [shape = 'u8[32768]{0}', space=vmem, size = 0x8000, scoped, tag = 'input window, operand 5, single buffered']
    #allocation9 [shape = 's32[1]{0}', space=sflag, size = 0x4, scoped, tag = 'scoped memory for tpu_custom_call.1']
    #allocation10 [shape = 'u8[4096]{0}', space=vmem, size = 0x1000, scoped, tag = 'output window, operand 0, single buffered']
    %12 = vsyncpa [#allocation3], 0
    %13 = vsyncpa [#allocation6], 0
    %14 = vsyncpa [#allocation9], 0
    %15 = vsyncpa [#allocation4], 0
    // Predicated region
    $region2: #{tpu_custom_call.1} parent=1 // pred_check
      _
    $region3: #{tpu_custom_call.1} parent=1 // pred_check_branch
      %17 = sbr.rel (0) target = $region5
    $region4: #{tpu_custom_call.1} parent=1 // pred_region
      %19 = vsyncadd [#allocation3], 1568
      %s20 = sshll.u32 %s0, 4
      %s21 = int_to_ptr.hbm [resolvable:$true] %s20
      %s22 = sshll.u32 [#allocation2], 4
      %s23 = int_to_ptr.vmem [resolvable:$true] %s22
      %28 = dma.hbm_to_vmem [thread:$0]  %s21, 224, %s23, [#allocation3], 224, 224, 14
    $region5: #{tpu_custom_call.1} parent=1 // pred_fallthru
      _
    // Predicated region
    $region6: #{tpu_custom_call.1} parent=1 // pred_check
      _
    $region7: #{tpu_custom_call.1} parent=1 // pred_check_branch
      %30 = sbr.rel (0) target = $region9
    $region8: #{tpu_custom_call.1} parent=1 // pred_region
      %32 = vsyncadd [#allocation6], 0
      %s33 = sshll.u32 %s1, 4
      %s34 = int_to_ptr.hbm [resolvable:$true] %s33
      %s35 = sshll.u32 [#allocation5], 4
      %s36 = int_to_ptr.vmem [resolvable:$true] %s35
      %41 = dma.hbm_to_vmem [thread:$0]  %s34, 6272, %s36, [#allocation6], 64, 64, 4
    $region9: #{tpu_custom_call.1} parent=1 // pred_fallthru
      _
    // Predicated region
    $region10: #{tpu_custom_call.1} parent=1 // pred_check
      _
    $region11: #{tpu_custom_call.1} parent=1 // pred_check_branch
      %43 = sbr.rel (0) target = $region13
    $region12: #{tpu_custom_call.1} parent=1 // pred_region
      _
    $region13: #{tpu_custom_call.1} parent=1 // pred_fallthru
      _
    // Predicated region
    $region14: #{tpu_custom_call.1} parent=1 // pred_check
      _
    $region15: #{tpu_custom_call.1} parent=1 // pred_check_branch
      %45 = sbr.rel (0) target = $region17
    $region16: #{tpu_custom_call.1} parent=1 // pred_region
      %47 = vsyncadd [#allocation6], 0
      %s48 = sshll.u32 %s3, 4
      %s49 = int_to_ptr.hbm [resolvable:$true] %s48
      %s50 = sshll.u32 [#allocation7], 4
      %s51 = int_to_ptr.vmem [resolvable:$true] %s50
      %56 = dma.hbm_to_vmem [thread:$0]  %s49, 1024, %s51, [#allocation6], 64, 64, 4
    $region17: #{tpu_custom_call.1} parent=1 // pred_fallthru
      _
    // Predicated region
    $region18: #{tpu_custom_call.1} parent=1 // pred_check
      _
    $region19: #{tpu_custom_call.1} parent=1 // pred_check_branch
      %58 = sbr.rel (0) target = $region21
    $region20: #{tpu_custom_call.1} parent=1 // pred_region
      _
    $region21: #{tpu_custom_call.1} parent=1 // pred_fallthru
      _
    // Predicated region
    $region22: #{tpu_custom_call.1} parent=1 // pred_check
      _
    $region23: #{tpu_custom_call.1} parent=1 // pred_check_branch
      %60 = sbr.rel (0) target = $region25
    $region24: #{tpu_custom_call.1} parent=1 // pred_region
      %62 = vsyncadd [#allocation9], 0
      %s63 = sshll.u32 %s5, 4
      %s64 = int_to_ptr.hbm [resolvable:$true] %s63
      %s65 = sshll.u32 [#allocation8], 4
      %s66 = int_to_ptr.vmem [resolvable:$true] %s65
      %71 = dma.hbm_to_vmem [thread:$0]  %s64, 1024, %s66, [#allocation9], 64, 64, 4
    $region25: #{tpu_custom_call.1} parent=1 // pred_fallthru
      _
    // Predicated region
    $region26: #{tpu_custom_call.1} parent=1 // pred_check
      _
    $region27: #{tpu_custom_call.1} parent=1 // pred_check_branch
      %73 = sbr.rel (0) target = $region29
    $region28: #{tpu_custom_call.1} parent=1 // pred_region
      _
    $region29: #{tpu_custom_call.1} parent=1 // pred_fallthru
      _
    // Predicated region
    $region30: #{tpu_custom_call.1} parent=1 // pred_check
      _
    $region31: #{tpu_custom_call.1} parent=1 // pred_check_branch
      %75 = sbr.rel (0) target = $region33
    $region32: #{tpu_custom_call.1} parent=1 // pred_region
      %77 = dma.done [#allocation3], 1792
    $region33: #{tpu_custom_call.1} parent=1 // pred_fallthru
      _
    // Predicated region
    $region34: #{tpu_custom_call.1} parent=1 // pred_check
      _
    $region35: #{tpu_custom_call.1} parent=1 // pred_check_branch
      %79 = sbr.rel (0) target = $region37
    $region36: #{tpu_custom_call.1} parent=1 // pred_region
      %81 = dma.done [#allocation6], 6272
    $region37: #{tpu_custom_call.1} parent=1 // pred_fallthru
      _
    // Predicated region
    $region38: #{tpu_custom_call.1} parent=1 // pred_check
      _
    $region39: #{tpu_custom_call.1} parent=1 // pred_check_branch
      %83 = sbr.rel (0) target = $region41
    $region40: #{tpu_custom_call.1} parent=1 // pred_region
      %85 = dma.done [#allocation6], 1024
    $region41: #{tpu_custom_call.1} parent=1 // pred_fallthru
      _
    // Predicated region
    $region42: #{tpu_custom_call.1} parent=1 // pred_check
      _
    $region43: #{tpu_custom_call.1} parent=1 // pred_check_branch
      %87 = sbr.rel (0) target = $region45
    $region44: #{tpu_custom_call.1} parent=1 // pred_region
      %89 = dma.done [#allocation9], 1024
    $region45: #{tpu_custom_call.1} parent=1 // pred_fallthru
      _
    %v91 = vld [vmem:[#allocation2] sm:$0xff]
    %v92 = vld [vmem:[#allocation2 + $0x8] sm:$0x3f]
    %v93 = vld [vmem:[#allocation2 + $0xe] sm:$0xff]
    %v94 = vld [vmem:[#allocation2 + $0x16] sm:$0x3f]
    %v95 = vld [vmem:[#allocation2 + $0x1c] sm:$0xff]
    %v96 = vld [vmem:[#allocation2 + $0x24] sm:$0x3f]
    %v97 = vld [vmem:[#allocation2 + $0x2a] sm:$0xff]
    %v98 = vld [vmem:[#allocation2 + $0x32] sm:$0x3f]
    %v99 = vld [vmem:[#allocation2 + $0x38] sm:$0xff]
    %v100 = vld [vmem:[#allocation2 + $0x40] sm:$0x3f]
    %v101 = vld [vmem:[#allocation2 + $0x46] sm:$0xff]
    %v102 = vld [vmem:[#allocation2 + $0x4e] sm:$0x3f]
    %v103 = vld [vmem:[#allocation2 + $0x54] sm:$0xff]
    %v104 = vld [vmem:[#allocation2 + $0x5c] sm:$0x3f]
    %v105 = vld [vmem:[#allocation2 + $0x62] sm:$0xff]
    %v106 = vld [vmem:[#allocation2 + $0x6a] sm:$0x3f]
    %123 = vst [vmem:[#allocation1] ss:$4 sm:$0xff] %v91
    %s124 = scalar_lea.vmem [#allocation1], 1
    %125 = vst [vmem:[%s124] ss:$4 sm:$0xff] %v93
    %s126 = scalar_lea.vmem [#allocation1], 2
    %127 = vst [vmem:[%s126] ss:$4 sm:$0xff] %v95
    %s128 = scalar_lea.vmem [#allocation1], 3
    %129 = vst [vmem:[%s128] ss:$4 sm:$0xff] %v97
    %s130 = scalar_lea.vmem [#allocation1], 32
    %131 = vst [vmem:[%s130] ss:$4 sm:$0xff] %v92
    %s132 = scalar_lea.vmem [#allocation1], 33
    %133 = vst [vmem:[%s132] ss:$4 sm:$0xff] %v94
    %s134 = scalar_lea.vmem [#allocation1], 34
    %135 = vst [vmem:[%s134] ss:$4 sm:$0xff] %v96
    %s136 = scalar_lea.vmem [#allocation1], 35
    %137 = vst [vmem:[%s136] ss:$4 sm:$0xff] %v98
    %v138 = vld.sshfl [vmem:[#allocation1] sm:$0xff pattern:$0x73625140]
    %v139 = vld.sshfl [vmem:[#allocation1 + $0x8] sm:$0xff pattern:$0x73625140]
    %v140 = vld.sshfl [vmem:[#allocation1 + $0x10] sm:$0xff pattern:$0x73625140]
    %v141 = vld.sshfl [vmem:[#allocation1 + $0x18] sm:$0xff pattern:$0x73625140]
    %v142 = vld.sshfl [vmem:[#allocation1 + $0x20] sm:$0xff pattern:$0x73625140]
    %v143 = vld.sshfl [vmem:[#allocation1 + $0x28] sm:$0xff pattern:$0x73625140]
    %v144 = vld.sshfl [vmem:[#allocation1 + $0x30] sm:$0xff pattern:$0x73625140]
    %145 = vst [vmem:[#allocation1] ss:$4 sm:$0xff] %v99
    %146 = vst [vmem:[%s124] ss:$4 sm:$0xff] %v101
    %147 = vst [vmem:[%s126] ss:$4 sm:$0xff] %v103
    %148 = vst [vmem:[%s128] ss:$4 sm:$0xff] %v105
    %149 = vst [vmem:[%s130] ss:$4 sm:$0xff] %v100
    %150 = vst [vmem:[%s132] ss:$4 sm:$0xff] %v102
    %151 = vst [vmem:[%s134] ss:$4 sm:$0xff] %v104
    %152 = vst [vmem:[%s136] ss:$4 sm:$0xff] %v106
    %v153 = vld.sshfl [vmem:[#allocation1] sm:$0xff pattern:$0x73625140]
    %v154 = vld.sshfl [vmem:[#allocation1 + $0x8] sm:$0xff pattern:$0x73625140]
    %v155 = vld.sshfl [vmem:[#allocation1 + $0x10] sm:$0xff pattern:$0x73625140]
    %v156 = vld.sshfl [vmem:[#allocation1 + $0x18] sm:$0xff pattern:$0x73625140]
    %v157 = vld.sshfl [vmem:[#allocation1 + $0x20] sm:$0xff pattern:$0x73625140]
    %v158 = vld.sshfl [vmem:[#allocation1 + $0x28] sm:$0xff pattern:$0x73625140]
    %v159 = vld.sshfl [vmem:[#allocation1 + $0x30] sm:$0xff pattern:$0x73625140]
    %v174 = vpack.c.bf16 %v153, %v138
    %v175 = vpack.c.bf16 %v154, %v139
    %v176 = vpack.c.bf16 %v155, %v140
    %v177 = vpack.c.bf16 %v156, %v141
    %v178 = vpack.c.bf16 %v157, %v142
    %v179 = vpack.c.bf16 %v158, %v143
    %v180 = vpack.c.bf16 %v159, %v144
    %v181 = vld [vmem:[#allocation5] sm:$0xf]
    %v182 = vld [vmem:[#allocation5 + $0x4] sm:$0xf]
    %v183 = vld [vmem:[#allocation5 + $0x8] sm:$0xf]
    %v184 = vld [vmem:[#allocation5 + $0xc] sm:$0xf]
    %v185 = vld [vmem:[#allocation5 + $0x10] sm:$0xf]
    %v186 = vld [vmem:[#allocation5 + $0x14] sm:$0xf]
    %v187 = vld [vmem:[#allocation5 + $0x18] sm:$0xf]
    %v188 = vld [vmem:[#allocation5 + $0x1c] sm:$0xf]
    %v189 = vld [vmem:[#allocation5 + $0x20] sm:$0xf]
    %v190 = vld [vmem:[#allocation5 + $0x24] sm:$0xf]
    %v191 = vld [vmem:[#allocation5 + $0x28] sm:$0xf]
    %v192 = vld [vmem:[#allocation5 + $0x2c] sm:$0xf]
    %v193 = vld [vmem:[#allocation5 + $0x30] sm:$0xf]
    %v194 = vld [vmem:[#allocation5 + $0x34] sm:$0xf]
    %v195 = vld [vmem:[#allocation5 + $0x38] sm:$0xf]
    %v196 = vld [vmem:[#allocation5 + $0x3c] sm:$0xf]
    %v197 = vld [vmem:[#allocation5 + $0x40] sm:$0xf]
    %v198 = vld [vmem:[#allocation5 + $0x44] sm:$0xf]
    %v199 = vld [vmem:[#allocation5 + $0x48] sm:$0xf]
    %v200 = vld [vmem:[#allocation5 + $0x4c] sm:$0xf]
    %v201 = vld [vmem:[#allocation5 + $0x50] sm:$0xf]
    %v202 = vld [vmem:[#allocation5 + $0x54] sm:$0xf]
    %v203 = vld [vmem:[#allocation5 + $0x58] sm:$0xf]
    %v204 = vld [vmem:[#allocation5 + $0x5c] sm:$0xf]
    %v205 = vld [vmem:[#allocation5 + $0x60] sm:$0xf]
    %v206 = vld [vmem:[#allocation5 + $0x64] sm:$0xf]
    %v207 = vld [vmem:[#allocation5 + $0x68] sm:$0xf]
    %v208 = vld [vmem:[#allocation5 + $0x6c] sm:$0xf]
    %v209 = vld [vmem:[#allocation5 + $0x70] sm:$0xf]
    %v210 = vld [vmem:[#allocation5 + $0x74] sm:$0xf]
    %v211 = vld [vmem:[#allocation5 + $0x78] sm:$0xf]
    %v212 = vld [vmem:[#allocation5 + $0x7c] sm:$0xf]
    %v213 = vld [vmem:[#allocation5 + $0x80] sm:$0xf]
    %v214 = vld [vmem:[#allocation5 + $0x84] sm:$0xf]
    %v215 = vld [vmem:[#allocation5 + $0x88] sm:$0xf]
    %v216 = vld [vmem:[#allocation5 + $0x8c] sm:$0xf]
    %v217 = vld [vmem:[#allocation5 + $0x90] sm:$0xf]
    %v218 = vld [vmem:[#allocation5 + $0x94] sm:$0xf]
    %v219 = vld [vmem:[#allocation5 + $0x98] sm:$0xf]
    %v220 = vld [vmem:[#allocation5 + $0x9c] sm:$0xf]
    %v221 = vld [vmem:[#allocation5 + $0xa0] sm:$0xf]
    %v222 = vld [vmem:[#allocation5 + $0xa4] sm:$0xf]
    %v223 = vld [vmem:[#allocation5 + $0xa8] sm:$0xf]
    %v224 = vld [vmem:[#allocation5 + $0xac] sm:$0xf]
    %v225 = vld [vmem:[#allocation5 + $0xb0] sm:$0xf]
    %v226 = vld [vmem:[#allocation5 + $0xb4] sm:$0xf]
    %v227 = vld [vmem:[#allocation5 + $0xb8] sm:$0xf]
    %v228 = vld [vmem:[#allocation5 + $0xbc] sm:$0xf]
    %v229 = vld [vmem:[#allocation5 + $0xc0] sm:$0xf]
    %v230 = vld [vmem:[#allocation5 + $0xc4] sm:$0xf]
    %v231 = vld [vmem:[#allocation5 + $0xc8] sm:$0xf]
    %v232 = vld [vmem:[#allocation5 + $0xcc] sm:$0xf]
    %v233 = vld [vmem:[#allocation5 + $0xd0] sm:$0xf]
    %v234 = vld [vmem:[#allocation5 + $0xd4] sm:$0xf]
    %v235 = vld [vmem:[#allocation5 + $0xd8] sm:$0xf]
    %v236 = vld [vmem:[#allocation5 + $0xdc] sm:$0xf]
    %v237 = vld [vmem:[#allocation5 + $0xe0] sm:$0xf]
    %v238 = vld [vmem:[#allocation5 + $0xe4] sm:$0xf]
    %v239 = vld [vmem:[#allocation5 + $0xe8] sm:$0xf]
    %v240 = vld [vmem:[#allocation5 + $0xec] sm:$0xf]
    %v241 = vld [vmem:[#allocation5 + $0xf0] sm:$0xf]
    %v242 = vld [vmem:[#allocation5 + $0xf4] sm:$0xf]
    %v243 = vld [vmem:[#allocation5 + $0xf8] sm:$0xf]
    %v244 = vld [vmem:[#allocation5 + $0xfc] sm:$0xf]
    %v245 = vld [vmem:[#allocation5 + $0x100] sm:$0xf]
    %v246 = vld [vmem:[#allocation5 + $0x104] sm:$0xf]
    %v247 = vld [vmem:[#allocation5 + $0x108] sm:$0xf]
    %v248 = vld [vmem:[#allocation5 + $0x10c] sm:$0xf]
    %v249 = vld [vmem:[#allocation5 + $0x110] sm:$0xf]
    %v250 = vld [vmem:[#allocation5 + $0x114] sm:$0xf]
    %v251 = vld [vmem:[#allocation5 + $0x118] sm:$0xf]
    %v252 = vld [vmem:[#allocation5 + $0x11c] sm:$0xf]
    %v253 = vld [vmem:[#allocation5 + $0x120] sm:$0xf]
    %v254 = vld [vmem:[#allocation5 + $0x124] sm:$0xf]
    %v255 = vld [vmem:[#allocation5 + $0x128] sm:$0xf]
    %v256 = vld [vmem:[#allocation5 + $0x12c] sm:$0xf]
    %v257 = vld [vmem:[#allocation5 + $0x130] sm:$0xf]
    %v258 = vld [vmem:[#allocation5 + $0x134] sm:$0xf]
    %v259 = vld [vmem:[#allocation5 + $0x138] sm:$0xf]
    %v260 = vld [vmem:[#allocation5 + $0x13c] sm:$0xf]
    %v261 = vld [vmem:[#allocation5 + $0x140] sm:$0xf]
    %v262 = vld [vmem:[#allocation5 + $0x144] sm:$0xf]
    %v263 = vld [vmem:[#allocation5 + $0x148] sm:$0xf]
    %v264 = vld [vmem:[#allocation5 + $0x14c] sm:$0xf]
    %v265 = vld [vmem:[#allocation5 + $0x150] sm:$0xf]
    %v266 = vld [vmem:[#allocation5 + $0x154] sm:$0xf]
    %v267 = vld [vmem:[#allocation5 + $0x158] sm:$0xf]
    %v268 = vld [vmem:[#allocation5 + $0x15c] sm:$0xf]
    %v269 = vld [vmem:[#allocation5 + $0x160] sm:$0xf]
    %v270 = vld [vmem:[#allocation5 + $0x164] sm:$0xf]
    %v271 = vld [vmem:[#allocation5 + $0x168] sm:$0xf]
    %v272 = vld [vmem:[#allocation5 + $0x16c] sm:$0xf]
    %v273 = vld [vmem:[#allocation5 + $0x170] sm:$0xf]
    %v274 = vld [vmem:[#allocation5 + $0x174] sm:$0xf]
    %v275 = vld [vmem:[#allocation5 + $0x178] sm:$0xf]
    %v276 = vld [vmem:[#allocation5 + $0x17c] sm:$0xf]
    %v277 = vld [vmem:[#allocation5 + $0x180] sm:$0xf]
    %v278 = vld [vmem:[#allocation5 + $0x184] sm:$0xf]
    %v279 = vld [vmem:[%s2] sm:$0x1]
    %v281 = vperm.slane %v279, 0
    %v381 = vunpack.c.l.b16 %v181
    %v382 = vunpack.c.l.b16 %v182
    %v383 = vunpack.c.l.b16 %v183
    %v384 = vunpack.c.l.b16 %v184
    %v385 = vunpack.c.l.b16 %v185
    %v386 = vunpack.c.l.b16 %v186
    %v387 = vunpack.c.l.b16 %v187
    %v388 = vunpack.c.l.b16 %v188
    %v389 = vunpack.c.l.b16 %v189
    %v390 = vunpack.c.l.b16 %v190
    %v391 = vunpack.c.l.b16 %v191
    %v392 = vunpack.c.l.b16 %v192
    %v393 = vunpack.c.l.b16 %v193
    %v394 = vunpack.c.l.b16 %v194
    %v395 = vunpack.c.l.b16 %v195
    %v396 = vunpack.c.l.b16 %v196
    %v397 = vunpack.c.l.b16 %v197
    %v398 = vunpack.c.l.b16 %v198
    %v399 = vunpack.c.l.b16 %v199
    %v400 = vunpack.c.l.b16 %v200
    %v401 = vunpack.c.l.b16 %v201
    %v402 = vunpack.c.l.b16 %v202
    %v403 = vunpack.c.l.b16 %v203
    %v404 = vunpack.c.l.b16 %v204
    %v405 = vunpack.c.l.b16 %v205
    %v406 = vunpack.c.l.b16 %v206
    %v407 = vunpack.c.l.b16 %v207
    %v408 = vunpack.c.l.b16 %v208
    %v409 = vunpack.c.l.b16 %v209
    %v410 = vunpack.c.l.b16 %v210
    %v411 = vunpack.c.l.b16 %v211
    %v412 = vunpack.c.l.b16 %v212
    %v413 = vunpack.c.l.b16 %v213
    %v414 = vunpack.c.l.b16 %v214
    %v415 = vunpack.c.l.b16 %v215
    %v416 = vunpack.c.l.b16 %v216
    %v417 = vunpack.c.l.b16 %v217
    %v418 = vunpack.c.l.b16 %v218
    %v419 = vunpack.c.l.b16 %v219
    %v420 = vunpack.c.l.b16 %v220
    %v421 = vunpack.c.l.b16 %v221
    %v422 = vunpack.c.l.b16 %v222
    %v423 = vunpack.c.l.b16 %v223
    %v424 = vunpack.c.l.b16 %v224
    %v425 = vunpack.c.l.b16 %v225
    %v426 = vunpack.c.l.b16 %v226
    %v427 = vunpack.c.l.b16 %v227
    %v428 = vunpack.c.l.b16 %v228
    %v429 = vunpack.c.l.b16 %v229
    %v430 = vunpack.c.l.b16 %v230
    %v431 = vunpack.c.l.b16 %v231
    %v432 = vunpack.c.l.b16 %v232
    %v433 = vunpack.c.l.b16 %v233
    %v434 = vunpack.c.l.b16 %v234
    %v435 = vunpack.c.l.b16 %v235
    %v436 = vunpack.c.l.b16 %v236
    %v437 = vunpack.c.l.b16 %v237
    %v438 = vunpack.c.l.b16 %v238
    %v439 = vunpack.c.l.b16 %v239
    %v440 = vunpack.c.l.b16 %v240
    %v441 = vunpack.c.l.b16 %v241
    %v442 = vunpack.c.l.b16 %v242
    %v443 = vunpack.c.l.b16 %v243
    %v444 = vunpack.c.l.b16 %v244
    %v445 = vunpack.c.l.b16 %v245
    %v446 = vunpack.c.l.b16 %v246
    %v447 = vunpack.c.l.b16 %v247
    %v448 = vunpack.c.l.b16 %v248
    %v449 = vunpack.c.l.b16 %v249
    %v450 = vunpack.c.l.b16 %v250
    %v451 = vunpack.c.l.b16 %v251
    %v452 = vunpack.c.l.b16 %v252
    %v453 = vunpack.c.l.b16 %v253
    %v454 = vunpack.c.l.b16 %v254
    %v455 = vunpack.c.l.b16 %v255
    %v456 = vunpack.c.l.b16 %v256
    %v457 = vunpack.c.l.b16 %v257
    %v458 = vunpack.c.l.b16 %v258
    %v459 = vunpack.c.l.b16 %v259
    %v460 = vunpack.c.l.b16 %v260
    %v461 = vunpack.c.l.b16 %v261
    %v462 = vunpack.c.l.b16 %v262
    %v463 = vunpack.c.l.b16 %v263
    %v464 = vunpack.c.l.b16 %v264
    %v465 = vunpack.c.l.b16 %v265
    %v466 = vunpack.c.l.b16 %v266
    %v467 = vunpack.c.l.b16 %v267
    %v468 = vunpack.c.l.b16 %v268
    %v469 = vunpack.c.l.b16 %v269
    %v470 = vunpack.c.l.b16 %v270
    %v471 = vunpack.c.l.b16 %v271
    %v472 = vunpack.c.l.b16 %v272
    %v473 = vunpack.c.l.b16 %v273
    %v474 = vunpack.c.l.b16 %v274
    %v475 = vunpack.c.l.b16 %v275
    %v476 = vunpack.c.l.b16 %v276
    %v477 = vunpack.c.l.b16 %v277
    %v478 = vunpack.c.l.b16 %v278
    %v479 = vpack.c.b16 %v382, %v381
    %v480 = vpack.c.b16 %v384, %v383
    %v481 = vpack.c.b16 %v386, %v385
    %v482 = vpack.c.b16 %v388, %v387
    %v483 = vpack.c.b16 %v390, %v389
    %v484 = vpack.c.b16 %v392, %v391
    %v485 = vpack.c.b16 %v394, %v393
    %v486 = vpack.c.b16 %v396, %v395
    %v487 = vpack.c.b16 %v398, %v397
    %v488 = vpack.c.b16 %v400, %v399
    %v489 = vpack.c.b16 %v402, %v401
    %v490 = vpack.c.b16 %v404, %v403
    %v491 = vpack.c.b16 %v406, %v405
    %v492 = vpack.c.b16 %v408, %v407
    %v493 = vpack.c.b16 %v410, %v409
    %v494 = vpack.c.b16 %v412, %v411
    %v495 = vpack.c.b16 %v414, %v413
    %v496 = vpack.c.b16 %v416, %v415
    %v497 = vpack.c.b16 %v418, %v417
    %v498 = vpack.c.b16 %v420, %v419
    %v499 = vpack.c.b16 %v422, %v421
    %v500 = vpack.c.b16 %v424, %v423
    %v501 = vpack.c.b16 %v426, %v425
    %v502 = vpack.c.b16 %v428, %v427
    %v503 = vpack.c.b16 %v430, %v429
    %v504 = vpack.c.b16 %v432, %v431
    %v505 = vpack.c.b16 %v434, %v433
    %v506 = vpack.c.b16 %v436, %v435
    %v507 = vpack.c.b16 %v438, %v437
    %v508 = vpack.c.b16 %v440, %v439
    %v509 = vpack.c.b16 %v442, %v441
    %v510 = vpack.c.b16 %v444, %v443
    %v511 = vpack.c.b16 %v446, %v445
    %v512 = vpack.c.b16 %v448, %v447
    %v513 = vpack.c.b16 %v450, %v449
    %v514 = vpack.c.b16 %v452, %v451
    %v515 = vpack.c.b16 %v454, %v453
    %v516 = vpack.c.b16 %v456, %v455
    %v517 = vpack.c.b16 %v458, %v457
    %v518 = vpack.c.b16 %v460, %v459
    %v519 = vpack.c.b16 %v462, %v461
    %v520 = vpack.c.b16 %v464, %v463
    %v521 = vpack.c.b16 %v466, %v465
    %v522 = vpack.c.b16 %v468, %v467
    %v523 = vpack.c.b16 %v470, %v469
    %v524 = vpack.c.b16 %v472, %v471
    %v525 = vpack.c.b16 %v474, %v473
    %v526 = vpack.c.b16 %v476, %v475
    %v527 = vpack.c.b16 %v478, %v477
    %vm577 = vcmask 130048
    %v579 = vsel %vm577, %v180, 0
    %581 = vmatpush.bf16.msra.mxu0 %v486
    %582 = vmatpush.bf16.msra.mxu0 %v485
    %583 = vmatpush.bf16.msra.mxu0 %v484
    %584 = vmatpush.bf16.msra.mxu0 %v483
    %585 = vmatpush.bf16.msra.mxu0 %v482
    %586 = vmatpush.bf16.msra.mxu0 %v481
    %587 = vmatpush.bf16.msra.mxu0 %v480
    %588 = vmatpush.bf16.msra.mxu0 %v479
    %589 = vmatmul.bf16.gmra.mxu0 %v174
    %v590 = vpop.f32.mrf.mxu0
    %v591 = vadd.f32 %v281, %v590
    %v592 = vpop.f32.mrf.mxu0
    %v593 = vadd.f32 %v281, %v592
    %594 = vdwg.mxu0
    %595 = vmatpush.bf16.msra.mxu0 %v494
    %596 = vmatpush.bf16.msra.mxu0 %v493
    %597 = vmatpush.bf16.msra.mxu0 %v492
    %598 = vmatpush.bf16.msra.mxu0 %v491
    %599 = vmatpush.bf16.msra.mxu0 %v490
    %600 = vmatpush.bf16.msra.mxu0 %v489
    %601 = vmatpush.bf16.msra.mxu0 %v488
    %602 = vmatpush.bf16.msra.mxu0 %v487
    %603 = vmatmul.bf16.gmra.mxu0 %v175
    %v604 = vpop.f32.mrf.mxu0
    %v605 = vadd.f32 %v591, %v604
    %v606 = vpop.f32.mrf.mxu0
    %v607 = vadd.f32 %v593, %v606
    %608 = vdwg.mxu0
    %609 = vmatpush.bf16.msra.mxu0 %v502
    %610 = vmatpush.bf16.msra.mxu0 %v501
    %611 = vmatpush.bf16.msra.mxu0 %v500
    %612 = vmatpush.bf16.msra.mxu0 %v499
    %613 = vmatpush.bf16.msra.mxu0 %v498
    %614 = vmatpush.bf16.msra.mxu0 %v497
    %615 = vmatpush.bf16.msra.mxu0 %v496
    %616 = vmatpush.bf16.msra.mxu0 %v495
    %617 = vmatmul.bf16.gmra.mxu0 %v176
    %v618 = vpop.f32.mrf.mxu0
    %v619 = vadd.f32 %v605, %v618
    %v620 = vpop.f32.mrf.mxu0
    %v621 = vadd.f32 %v607, %v620
    %622 = vdwg.mxu0
    %623 = vmatpush.bf16.msra.mxu0 %v510
    %624 = vmatpush.bf16.msra.mxu0 %v509
    %625 = vmatpush.bf16.msra.mxu0 %v508
    %626 = vmatpush.bf16.msra.mxu0 %v507
    %627 = vmatpush.bf16.msra.mxu0 %v506
    %628 = vmatpush.bf16.msra.mxu0 %v505
    %629 = vmatpush.bf16.msra.mxu0 %v504
    %630 = vmatpush.bf16.msra.mxu0 %v503
    %631 = vmatmul.bf16.gmra.mxu0 %v177
    %v632 = vpop.f32.mrf.mxu0
    %v633 = vadd.f32 %v619, %v632
    %v634 = vpop.f32.mrf.mxu0
    %v635 = vadd.f32 %v621, %v634
    %636 = vdwg.mxu0
    %637 = vmatpush.bf16.msra.mxu0 %v518
    %638 = vmatpush.bf16.msra.mxu0 %v517
    %639 = vmatpush.bf16.msra.mxu0 %v516
    %640 = vmatpush.bf16.msra.mxu0 %v515
    %641 = vmatpush.bf16.msra.mxu0 %v514
    %642 = vmatpush.bf16.msra.mxu0 %v513
    %643 = vmatpush.bf16.msra.mxu0 %v512
    %644 = vmatpush.bf16.msra.mxu0 %v511
    %645 = vmatmul.bf16.gmra.mxu0 %v178
    %v646 = vpop.f32.mrf.mxu0
    %v647 = vadd.f32 %v633, %v646
    %v648 = vpop.f32.mrf.mxu0
    %v649 = vadd.f32 %v635, %v648
    %650 = vdwg.mxu0
    %651 = vmatpush.bf16.msra.mxu0 %v526
    %652 = vmatpush.bf16.msra.mxu0 %v525
    %653 = vmatpush.bf16.msra.mxu0 %v524
    %654 = vmatpush.bf16.msra.mxu0 %v523
    %655 = vmatpush.bf16.msra.mxu0 %v522
    %656 = vmatpush.bf16.msra.mxu0 %v521
    %657 = vmatpush.bf16.msra.mxu0 %v520
    %658 = vmatpush.bf16.msra.mxu0 %v519
    %659 = vmatmul.bf16.gmra.mxu0 %v179
    %v660 = vpop.f32.mrf.mxu0
    %v661 = vadd.f32 %v647, %v660
    %v662 = vpop.f32.mrf.mxu0
    %v663 = vadd.f32 %v649, %v662
    %664 = vdwg.mxu0
    %665 = vmatpush.bf16.msra.mxu0 0
    %666 = vmatpush.bf16.msra.mxu0 0
    %667 = vmatpush.bf16.msra.mxu0 0
    %668 = vmatpush.bf16.msra.mxu0 0
    %669 = vmatpush.bf16.msra.mxu0 0
    %670 = vmatpush.bf16.msra.mxu0 0
    %671 = vmatpush.bf16.msra.mxu0 0
    %672 = vmatpush.bf16.msra.mxu0 %v527
    %673 = vmatmul.bf16.gmra.mxu0 %v579
    %v674 = vpop.f32.mrf.mxu0
    %v675 = vadd.f32 %v661, %v674
    %v676 = vpop.f32.mrf.mxu0
    %v677 = vadd.f32 %v663, %v676
    %678 = vdwg.mxu0
    %v679 = vmax.f32 %v675, 0.0
    %v680 = vmax.f32 %v677, 0.0
    %v681 = vpack.c.bf16 %v680, %v679
    %v682 = vld [vmem:[#allocation7] sm:$0xf]
    %v683 = vld [vmem:[#allocation7 + $0x4] sm:$0xf]
    %v684 = vld [vmem:[#allocation7 + $0x8] sm:$0xf]
    %v685 = vld [vmem:[#allocation7 + $0xc] sm:$0xf]
    %v686 = vld [vmem:[#allocation7 + $0x10] sm:$0xf]
    %v687 = vld [vmem:[#allocation7 + $0x14] sm:$0xf]
    %v688 = vld [vmem:[#allocation7 + $0x18] sm:$0xf]
    %v689 = vld [vmem:[#allocation7 + $0x1c] sm:$0xf]
    %v690 = vld [vmem:[#allocation7 + $0x20] sm:$0xf]
    %v691 = vld [vmem:[#allocation7 + $0x24] sm:$0xf]
    %v692 = vld [vmem:[#allocation7 + $0x28] sm:$0xf]
    %v693 = vld [vmem:[#allocation7 + $0x2c] sm:$0xf]
    %v694 = vld [vmem:[#allocation7 + $0x30] sm:$0xf]
    %v695 = vld [vmem:[#allocation7 + $0x34] sm:$0xf]
    %v696 = vld [vmem:[#allocation7 + $0x38] sm:$0xf]
    %v697 = vld [vmem:[#allocation7 + $0x3c] sm:$0xf]
    %v698 = vld [vmem:[%s4] sm:$0x1]
    %v700 = vperm.slane %v698, 0
    %v718 = vunpack.c.l.b16 %v682
    %v719 = vunpack.c.l.b16 %v683
    %v720 = vunpack.c.l.b16 %v684
    %v721 = vunpack.c.l.b16 %v685
    %v722 = vunpack.c.l.b16 %v686
    %v723 = vunpack.c.l.b16 %v687
    %v724 = vunpack.c.l.b16 %v688
    %v725 = vunpack.c.l.b16 %v689
    %v726 = vunpack.c.l.b16 %v690
    %v727 = vunpack.c.l.b16 %v691
    %v728 = vunpack.c.l.b16 %v692
    %v729 = vunpack.c.l.b16 %v693
    %v730 = vunpack.c.l.b16 %v694
    %v731 = vunpack.c.l.b16 %v695
    %v732 = vunpack.c.l.b16 %v696
    %v733 = vunpack.c.l.b16 %v697
    %v734 = vpack.c.b16 %v719, %v718
    %v735 = vpack.c.b16 %v721, %v720
    %v736 = vpack.c.b16 %v723, %v722
    %v737 = vpack.c.b16 %v725, %v724
    %v738 = vpack.c.b16 %v727, %v726
    %v739 = vpack.c.b16 %v729, %v728
    %v740 = vpack.c.b16 %v731, %v730
    %v741 = vpack.c.b16 %v733, %v732
    %750 = vmatpush.bf16.msra.mxu0 %v741
    %751 = vmatpush.bf16.msra.mxu0 %v740
    %752 = vmatpush.bf16.msra.mxu0 %v739
    %753 = vmatpush.bf16.msra.mxu0 %v738
    %754 = vmatpush.bf16.msra.mxu0 %v737
    %755 = vmatpush.bf16.msra.mxu0 %v736
    %756 = vmatpush.bf16.msra.mxu0 %v735
    %757 = vmatpush.bf16.msra.mxu0 %v734
    %758 = vmatmul.bf16.gmra.mxu0 %v681
    %v759 = vpop.f32.mrf.mxu0
    %v760 = vadd.f32 %v700, %v759
    %v761 = vpop.f32.mrf.mxu0
    %v762 = vadd.f32 %v700, %v761
    %763 = vdwg.mxu0
    %v764 = vmax.f32 %v760, 0.0
    %v765 = vmax.f32 %v762, 0.0
    %v766 = vpack.c.bf16 %v765, %v764
    %v767 = vld [vmem:[#allocation8] sm:$0xf]
    %v768 = vld [vmem:[#allocation8 + $0x4] sm:$0xf]
    %v769 = vld [vmem:[#allocation8 + $0x8] sm:$0xf]
    %v770 = vld [vmem:[#allocation8 + $0xc] sm:$0xf]
    %v771 = vld [vmem:[#allocation8 + $0x10] sm:$0xf]
    %v772 = vld [vmem:[#allocation8 + $0x14] sm:$0xf]
    %v773 = vld [vmem:[#allocation8 + $0x18] sm:$0xf]
    %v774 = vld [vmem:[#allocation8 + $0x1c] sm:$0xf]
    %v775 = vld [vmem:[#allocation8 + $0x20] sm:$0xf]
    %v776 = vld [vmem:[#allocation8 + $0x24] sm:$0xf]
    %v777 = vld [vmem:[#allocation8 + $0x28] sm:$0xf]
    %v778 = vld [vmem:[#allocation8 + $0x2c] sm:$0xf]
    %v779 = vld [vmem:[#allocation8 + $0x30] sm:$0xf]
    %v780 = vld [vmem:[#allocation8 + $0x34] sm:$0xf]
    %v781 = vld [vmem:[#allocation8 + $0x38] sm:$0xf]
    %v782 = vld [vmem:[#allocation8 + $0x3c] sm:$0xf]
    %v783 = vld [vmem:[%s6] sm:$0x1]
    %v785 = vperm.slane %v783, 0
    %v803 = vunpack.c.l.b16 %v767
    %v804 = vunpack.c.l.b16 %v768
    %v805 = vunpack.c.l.b16 %v769
    %v806 = vunpack.c.l.b16 %v770
    %v807 = vunpack.c.l.b16 %v771
    %v808 = vunpack.c.l.b16 %v772
    %v809 = vunpack.c.l.b16 %v773
    %v810 = vunpack.c.l.b16 %v774
    %v811 = vunpack.c.l.b16 %v775
    %v812 = vunpack.c.l.b16 %v776
    %v813 = vunpack.c.l.b16 %v777
    %v814 = vunpack.c.l.b16 %v778
    %v815 = vunpack.c.l.b16 %v779
    %v816 = vunpack.c.l.b16 %v780
    %v817 = vunpack.c.l.b16 %v781
    %v818 = vunpack.c.l.b16 %v782
    %v819 = vpack.c.b16 %v804, %v803
    %v820 = vpack.c.b16 %v806, %v805
    %v821 = vpack.c.b16 %v808, %v807
    %v822 = vpack.c.b16 %v810, %v809
    %v823 = vpack.c.b16 %v812, %v811
    %v824 = vpack.c.b16 %v814, %v813
    %v825 = vpack.c.b16 %v816, %v815
    %v826 = vpack.c.b16 %v818, %v817
    %835 = vmatpush.bf16.msra.mxu0 %v826
    %836 = vmatpush.bf16.msra.mxu0 %v825
    %837 = vmatpush.bf16.msra.mxu0 %v824
    %838 = vmatpush.bf16.msra.mxu0 %v823
    %839 = vmatpush.bf16.msra.mxu0 %v822
    %840 = vmatpush.bf16.msra.mxu0 %v821
    %841 = vmatpush.bf16.msra.mxu0 %v820
    %842 = vmatpush.bf16.msra.mxu0 %v819
    %843 = vmatmul.bf16.gmra.mxu0 %v766
    %v844 = vpop.f32.mrf.mxu0
    %v845 = vadd.f32 %v785, %v844
    %v846 = vpop.f32.mrf.mxu0
    %v847 = vadd.f32 %v785, %v846
    %848 = vdwg.mxu0
    %v849 = vpack.c.bf16 %v845, %v845
    %v850 = vpack.c.bf16 %v847, %v847
    %v853 = vrot.slane %v849, 3
    %v854 = vrot.slane %v850, 3
    %vm855 = vcmask 1040384
    %v858 = vsel %vm855, %v849, %v853
    %vm859 = vcmask 1041409
    %v860 = vsel %vm859, %v849, %v853
    %v862 = vrot.slane %v860, 1
    %vm863 = vcmask 1042434
    %v864 = vsel %vm863, %v849, %v853
    %v866 = vrot.slane %v864, 2
    %vm867 = vcmask 1043459
    %v868 = vsel %vm867, %v849, %v853
    %v870 = vrot.slane %v868, 3
    %v873 = vsel %vm855, %v850, %v854
    %v874 = vsel %vm859, %v850, %v854
    %v876 = vrot.slane %v874, 1
    %v877 = vsel %vm863, %v850, %v854
    %v879 = vrot.slane %v877, 2
    %v880 = vsel %vm867, %v850, %v854
    %v882 = vrot.slane %v880, 3
    %891 = vst [vmem:[#allocation10] sm:$0x1] %v858
    %892 = vst [vmem:[#allocation10 + $0x1] sm:$0x1] %v862
    %893 = vst [vmem:[#allocation10 + $0x2] sm:$0x1] %v866
    %894 = vst [vmem:[#allocation10 + $0x3] sm:$0x1] %v870
    %895 = vst [vmem:[#allocation10 + $0x4] sm:$0x1] %v873
    %896 = vst [vmem:[#allocation10 + $0x5] sm:$0x1] %v876
    %897 = vst [vmem:[#allocation10 + $0x6] sm:$0x1] %v879
    %898 = vst [vmem:[#allocation10 + $0x7] sm:$0x1] %v882
    // Predicated region
    $region46: #{tpu_custom_call.1} parent=1 // pred_check
      _
    $region47: #{tpu_custom_call.1} parent=1 // pred_check_branch
      %900 = sbr.rel (0) target = $region49
    $region48: #{tpu_custom_call.1} parent=1 // pred_region
      %902 = vsyncadd [#allocation4], 112
      %s903 = sshll.u32 [#allocation10], 4
      %s904 = int_to_ptr.vmem [resolvable:$true] %s903
      %s905 = sshll.u32 %s7, 4
      %s906 = int_to_ptr.hbm [resolvable:$true] %s905
      %911 = dma.vmem_to_hbm [thread:$0]  %s904, 16, %s906, [#allocation4], 16, 16, 1
    $region49: #{tpu_custom_call.1} parent=1 // pred_fallthru
      _
    // Predicated region
    $region50: #{tpu_custom_call.1} parent=1 // pred_check
      _
    $region51: #{tpu_custom_call.1} parent=1 // pred_check_branch
      %913 = sbr.rel (0) target = $region53
    $region52: #{tpu_custom_call.1} parent=1 // pred_region
      %915 = dma.done [#allocation4], 128
    $region53: #{tpu_custom_call.1} parent=1 // pred_fallthru
      _
    %916 = vsyncpa [#allocation3], 1
    %917 = vsyncpa [#allocation6], 1
    %918 = vsyncpa [#allocation9], 1
    %919 = vsyncpa [#allocation4], 1

</llo_original>
